<compile_context>
chip_gen: v7x
topology: tpu7x:2x2x1
jax: 0.10.0
libtpu: 0.0.40
codegen_flags: <defaults>
</compile_context>

<pallas_src>
import functools

import jax
import jax.numpy as jnp
import numpy as np
from jax.experimental import pallas as pl
from jax.experimental.pallas import tpu as pltpu

LANE = 128      # TPU lane width
SUBLANE = 8     # f32 sublane granularity


def _round_up(n, m):
    return ((n + m - 1) // m) * m


def _mlp_jacobian_kernel(x_ref, slab_ref, j_ref, *, offs, d_out_pad, b_tile):
    """One grid step = b_tile samples.

    x_ref:    (b_tile, 128)           augmented x rows (bias lane = 1, rest 0-padded)
    slab_ref: (rows, 128)             packed weights, VMEM-resident across the grid
    j_ref:    (b_tile, d_out_pad, 128) per-sample Jacobians (lane-dense)
    """
    o_w1t, o_w2t, o_w3, o_w2, o_w1 = offs

    w1t = slab_ref[pl.ds(o_w1t, LANE), :]        # (128,128)  [W1^T | b1 row | const-1 hook]
    w2t = slab_ref[pl.ds(o_w2t, LANE), :]        # (128,128)  [W2^T | b2 row]
    w3 = slab_ref[pl.ds(o_w3, d_out_pad), :]     # (d_out_pad,128)  W3 (reverse orientation)
    w2 = slab_ref[pl.ds(o_w2, LANE), :]          # (128,128)  W2 (reverse orientation)
    w1 = slab_ref[pl.ds(o_w1, LANE), :]          # (128,128)  W1 (reverse orientation)

    x = x_ref[...]                               # (B,128)

    # ---- forward pass (biases folded into augmented transposed weights) ----
    f1 = jnp.maximum(jnp.dot(x, w1t, preferred_element_type=jnp.float32), 0.0)   # (B,128)
    f2 = jnp.maximum(jnp.dot(f1, w2t, preferred_element_type=jnp.float32), 0.0)  # (B,128)
    m1 = (f1 > 0.0).astype(jnp.float32)          # (B,128); const-1 lane hits only zero cols
    m2 = (f2 > 0.0).astype(jnp.float32)          # (B,128); zero in all padding lanes

    # ---- reverse pass, fused across the tile ----
    # J_b = (W3 * m2_b) @ (W2 * m1_b) @ W1 ; stack the masked-W3 copies so the
    # W2 and W1 contractions are each ONE (B*d_out_pad,128)@(128,128) matmul.
    w3m = (w3[None, :, :] * m2[:, None, :]).reshape(b_tile * d_out_pad, LANE)
    t = jnp.dot(w3m, w2, preferred_element_type=jnp.float32)                     # (B*dop,128)
    t = (t.reshape(b_tile, d_out_pad, LANE) * m1[:, None, :]).reshape(
        b_tile * d_out_pad, LANE)
    j = jnp.dot(t, w1, preferred_element_type=jnp.float32)                        # (B*dop,128)
    j_ref[...] = j.reshape(b_tile, d_out_pad, LANE)


def pack_mlp_params(params):
    """Pack weights once (runs only when params change). Returns (slab, offs, dims)."""
    (w1, b1), (w2, b2), (w3, _b3) = params       # b3 never contributes to J -> dropped
    d_h1, d_in = w1.shape
    d_h2 = w2.shape[0]
    d_out = w3.shape[0]
    # TODO(synk): K-tile the contraction for hidden widths > 128 (v7x: 64 MiB VMEM).
    assert d_in < LANE and d_h1 < LANE and d_h2 <= LANE and d_out <= LANE
    d_out_pad = _round_up(d_out, SUBLANE)

    f32 = jnp.float32
    # Forward, transposed, bias-augmented: x carries a constant-1 lane at index d_in.
    w1t_aug = jnp.zeros((LANE, LANE), f32)
    w1t_aug = w1t_aug.at[:d_in, :d_h1].set(w1.T.astype(f32))
    w1t_aug = w1t_aug.at[d_in, :d_h1].set(b1.astype(f32))   # bias row, hit by x's 1-lane
    w1t_aug = w1t_aug.at[d_in, d_h1].set(1.0)                # propagate const-1 lane into f1

    w2t_aug = jnp.zeros((LANE, LANE), f32)
    w2t_aug = w2t_aug.at[:d_h1, :d_h2].set(w2.T.astype(f32))
    w2t_aug = w2t_aug.at[d_h1, :d_h2].set(b2.astype(f32))    # bias row, hit by f1's 1-lane

    # Reverse-pass (original) orientations, zero-padded.
    w3p = jnp.zeros((d_out_pad, LANE), f32).at[:d_out, :d_h2].set(w3.astype(f32))
    w2p = jnp.zeros((LANE, LANE), f32).at[:d_h2, :d_h1].set(w2.astype(f32))
    w1p = jnp.zeros((LANE, LANE), f32).at[:d_h1, :d_in].set(w1.astype(f32))

    slab = jnp.concatenate([w1t_aug, w2t_aug, w3p, w2p, w1p], axis=0)  # (512+dop, 128)
    offs = (0, LANE, 2 * LANE, 2 * LANE + d_out_pad, 3 * LANE + d_out_pad)
    dims = (d_in, d_h1, d_h2, d_out, d_out_pad)
    return slab, offs, dims


def mlp_jacobian_batched(xs, slab, offs, dims, *, b_tile=8):
    """xs: (n, d_in) f32; slab/offs/dims from pack_mlp_params. Returns (n, d_out, d_in)."""
    d_in, _d_h1, _d_h2, d_out, d_out_pad = dims
    n = xs.shape[0]
    n_pad = _round_up(max(n, 1), b_tile)

    # Only this tiny x slab is built per call; padded rows stay all-zero.
    x_aug = jnp.zeros((n_pad, LANE), jnp.float32)
    x_aug = x_aug.at[:n, :d_in].set(xs.astype(jnp.float32))
    x_aug = x_aug.at[:n, d_in].set(1.0)          # constant-1 bias lane

    rows = slab.shape[0]
    kernel = functools.partial(_mlp_jacobian_kernel, offs=tuple(offs),
                               d_out_pad=d_out_pad, b_tile=b_tile)
    j = pl.pallas_call(
        kernel,
        out_shape=jax.ShapeDtypeStruct((n_pad, d_out_pad, LANE), jnp.float32),
        grid=(n_pad // b_tile,),
        in_specs=[
            pl.BlockSpec((b_tile, LANE), lambda i: (i, 0)),   # x rows advance with grid
            pl.BlockSpec((rows, LANE), lambda i: (0, 0)),     # weight slab: VMEM-resident
        ],
        out_specs=pl.BlockSpec((b_tile, d_out_pad, LANE), lambda i: (i, 0, 0)),
        compiler_params=pltpu.CompilerParams(dimension_semantics=("parallel",)),
    )(x_aug, slab)
    return j[:n, :d_out, :d_in]


def mlp_jacobian(x, params):
    """Single-sample convenience path matching the torch module's forward(x)."""
    slab, offs, dims = pack_mlp_params(params)
    return mlp_jacobian_batched(x[None, :], slab, offs, dims)[0]


def ref_jacobian(x, params):
    """Pure-JAX reference mirroring the torch module exactly."""
    (w1, b1), (w2, b2), (w3, b3) = params
    z1 = w1 @ x + b1
    f1 = jnp.maximum(z1, 0.0)
    z2 = w2 @ f1 + b2
    f2 = jnp.maximum(z2, 0.0)
    J = w3 * (f2 > 0)[None, :]
    J = J @ w2
    J = J * (f1 > 0)[None, :]
    J = J @ w1
    return J


if __name__ == "__main__":
    d_in, d_h, d_out = 32, 32, 32   # MLP: Linear(32,32) ReLU Linear(32,32) ReLU Linear(32,32)

    key = jax.random.PRNGKey(0)
    ks = jax.random.split(key, 7)
    w1 = 0.1 * jax.random.normal(ks[0], (d_h, d_in), jnp.float32)
    b1 = 0.1 * jax.random.normal(ks[1], (d_h,), jnp.float32)
    w2 = 0.1 * jax.random.normal(ks[2], (d_h, d_h), jnp.float32)
    b2 = 0.1 * jax.random.normal(ks[3], (d_h,), jnp.float32)
    w3 = 0.1 * jax.random.normal(ks[4], (d_out, d_h), jnp.float32)
    b3 = 0.1 * jax.random.normal(ks[5], (d_out,), jnp.float32)
    params = ((w1, b1), (w2, b2), (w3, b3))

    n = 13   # deliberately not a multiple of the 8-row tile to exercise padding
    xs = jax.random.normal(ks[6], (n, d_in), jnp.float32)

    # Pack the weights ONCE; only the tiny x rows move per call.
    slab, offs, dims = pack_mlp_params(params)
    run = jax.jit(functools.partial(mlp_jacobian_batched, offs=offs, dims=dims))

    J = run(xs, slab)
    jax.block_until_ready(J)

    J_ref = jnp.stack([ref_jacobian(xs[i], params) for i in range(n)])
    np.testing.assert_allclose(np.asarray(J), np.asarray(J_ref), rtol=1e-5, atol=1e-5)

    # Single-sample path (torch-module-style forward(x)).
    J0 = mlp_jacobian(xs[0], params)
    jax.block_until_ready(J0)
    np.testing.assert_allclose(np.asarray(J0), np.asarray(J_ref[0]), rtol=1e-5, atol=1e-5)

    print("KERNEL_OK")
</pallas_src>

<mosaic_0001>
module attributes {stable_mosaic.version = 11 : i64} {
  func.func @_mlp_jacobian_kernel(%arg0: i32, %arg1: memref<8x128xf32, #tpu.memory_space<vmem>>, %arg2: memref<544x128xf32, #tpu.memory_space<vmem>>, %arg3: memref<8x32x128xf32, #tpu.memory_space<vmem>>) attributes {dimension_semantics = [#tpu.dimension_semantics<parallel>], iteration_bounds = array<i64: 2>, scalar_prefetch = 0 : i64, scratch_operands = 0 : i64, tpu.core_type = #tpu.core_type<tc>, window_params = [{transform_indices = @transform_0, window_bounds = array<i64: 8, 128>}, {pipeline_mode = #tpu.pipeline_mode<synchronous>, transform_indices = @transform_1, window_bounds = array<i64: 544, 128>}, {transform_indices = @transform_2, window_bounds = array<i64: 8, 32, 128>}]} {
    %c0 = arith.constant 0 : index
    %c0_0 = arith.constant 0 : index
    %0 = vector.load %arg2[%c0, %c0_0] : memref<544x128xf32, #tpu.memory_space<vmem>>, vector<128x128xf32>
    %c128 = arith.constant 128 : index
    %c0_1 = arith.constant 0 : index
    %1 = vector.load %arg2[%c128, %c0_1] : memref<544x128xf32, #tpu.memory_space<vmem>>, vector<128x128xf32>
    %c256 = arith.constant 256 : index
    %c0_2 = arith.constant 0 : index
    %2 = vector.load %arg2[%c256, %c0_2] : memref<544x128xf32, #tpu.memory_space<vmem>>, vector<32x128xf32>
    %c288 = arith.constant 288 : index
    %c0_3 = arith.constant 0 : index
    %3 = vector.load %arg2[%c288, %c0_3] : memref<544x128xf32, #tpu.memory_space<vmem>>, vector<128x128xf32>
    %c416 = arith.constant 416 : index
    %c0_4 = arith.constant 0 : index
    %4 = vector.load %arg2[%c416, %c0_4] : memref<544x128xf32, #tpu.memory_space<vmem>>, vector<128x128xf32>
    %c0_5 = arith.constant 0 : index
    %c0_6 = arith.constant 0 : index
    %5 = vector.load %arg1[%c0_5, %c0_6] : memref<8x128xf32, #tpu.memory_space<vmem>>, vector<8x128xf32>
    %cst = arith.constant dense<0.000000e+00> : vector<8x128xf32>
    %6 = tpu.matmul %5, %0, %cst {dimension_numbers = #tpu.dot_dimension_numbers<[1], [0], [0], [1], [0, 0, 1, 1], [], []>} : vector<8x128xf32>, vector<128x128xf32>, vector<8x128xf32> -> vector<8x128xf32>
    %cst_7 = arith.constant 0.000000e+00 : f32
    %7 = vector.broadcast %cst_7 : f32 to vector<8x128xf32>
    %8 = arith.maximumf %6, %7 : vector<8x128xf32>
    %cst_8 = arith.constant dense<0.000000e+00> : vector<8x128xf32>
    %9 = tpu.matmul %8, %1, %cst_8 {dimension_numbers = #tpu.dot_dimension_numbers<[1], [0], [0], [1], [0, 0, 1, 1], [], []>} : vector<8x128xf32>, vector<128x128xf32>, vector<8x128xf32> -> vector<8x128xf32>
    %cst_9 = arith.constant 0.000000e+00 : f32
    %10 = vector.broadcast %cst_9 : f32 to vector<8x128xf32>
    %11 = arith.maximumf %9, %10 : vector<8x128xf32>
    %cst_10 = arith.constant 0.000000e+00 : f32
    %12 = vector.broadcast %cst_10 : f32 to vector<8x128xf32>
    %13 = arith.cmpf ogt, %8, %12 : vector<8x128xf32>
    %14 = arith.extui %13 : vector<8x128xi1> to vector<8x128xi32>
    %15 = arith.sitofp %14 : vector<8x128xi32> to vector<8x128xf32>
    %cst_11 = arith.constant 0.000000e+00 : f32
    %16 = vector.broadcast %cst_11 : f32 to vector<8x128xf32>
    %17 = arith.cmpf ogt, %11, %16 : vector<8x128xf32>
    %18 = arith.extui %17 : vector<8x128xi1> to vector<8x128xi32>
    %19 = arith.sitofp %18 : vector<8x128xi32> to vector<8x128xf32>
    %20 = vector.shape_cast %2 : vector<32x128xf32> to vector<1x32x128xf32>
    %21 = vector.shape_cast %19 : vector<8x128xf32> to vector<8x1x128xf32>
    %22 = vector.broadcast %20 : vector<1x32x128xf32> to vector<8x32x128xf32>
    %23 = vector.broadcast %21 : vector<8x1x128xf32> to vector<8x32x128xf32>
    %24 = arith.mulf %22, %23 : vector<8x32x128xf32>
    %25 = vector.shape_cast %24 : vector<8x32x128xf32> to vector<256x128xf32>
    %cst_12 = arith.constant dense<0.000000e+00> : vector<256x128xf32>
    %26 = tpu.matmul %25, %3, %cst_12 {dimension_numbers = #tpu.dot_dimension_numbers<[1], [0], [0], [1], [0, 0, 1, 1], [], []>} : vector<256x128xf32>, vector<128x128xf32>, vector<256x128xf32> -> vector<256x128xf32>
    %27 = vector.shape_cast %26 : vector<256x128xf32> to vector<8x32x128xf32>
    %28 = vector.shape_cast %15 : vector<8x128xf32> to vector<8x1x128xf32>
    %29 = vector.broadcast %28 : vector<8x1x128xf32> to vector<8x32x128xf32>
    %30 = arith.mulf %27, %29 : vector<8x32x128xf32>
    %31 = vector.shape_cast %30 : vector<8x32x128xf32> to vector<256x128xf32>
    %cst_13 = arith.constant dense<0.000000e+00> : vector<256x128xf32>
    %32 = tpu.matmul %31, %4, %cst_13 {dimension_numbers = #tpu.dot_dimension_numbers<[1], [0], [0], [1], [0, 0, 1, 1], [], []>} : vector<256x128xf32>, vector<128x128xf32>, vector<256x128xf32> -> vector<256x128xf32>
    %33 = vector.shape_cast %32 : vector<256x128xf32> to vector<8x32x128xf32>
    %c0_14 = arith.constant 0 : index
    %c0_15 = arith.constant 0 : index
    %c0_16 = arith.constant 0 : index
    %34 = vector.load %arg3[%c0_14, %c0_15, %c0_16] : memref<8x32x128xf32, #tpu.memory_space<vmem>>, vector<8x32x128xf32>
    tpu.vector_store %arg3[%c0_14, %c0_15, %c0_16], %33 {strides = array<i32>} : memref<8x32x128xf32, #tpu.memory_space<vmem>>, vector<8x32x128xf32>,
    return
  }
  func.func @transform_0(%arg0: i32) -> (i32, i32) {
    %c0_i32 = arith.constant 0 : i32
    %c0_i32_0 = arith.constant 0 : i32
    return %arg0, %c0_i32 : i32, i32
  }
  func.func @transform_1(%arg0: i32) -> (i32, i32) {
    %c0_i32 = arith.constant 0 : i32
    %c0_i32_0 = arith.constant 0 : i32
    %c0_i32_1 = arith.constant 0 : i32
    return %c0_i32, %c0_i32_0 : i32, i32
  }
  func.func @transform_2(%arg0: i32) -> (i32, i32, i32) {
    %c0_i32 = arith.constant 0 : i32
    %c0_i32_0 = arith.constant 0 : i32
    %c0_i32_1 = arith.constant 0 : i32
    return %arg0, %c0_i32, %c0_i32_0 : i32, i32, i32
  }
}

</mosaic_0001>

<llo_original>
// kernel: mlp_jacobian_batched.1
$region0: #{mlp_jacobian_batched.1}
  #allocation0 [shape = 'u32[]', space=smem, size = 0x4, offset = 0x4, fixed_abs, tag = 'smem constant byte address 0x4 - core index']
  #allocation1 [shape = 'u32[144,128]{1,0:T(1,128)}', space=vmem, size = 0x12000, scoped, tag = 'internal scratch']
  %s0 = inlined_call_operand.vmem [shape: f32[16,128], index: 0, kind: input, shape index: {}]
  %s1 = inlined_call_operand.hbm [shape: f32[544,128], index: 1, kind: input, shape index: {}]
  %s2 = inlined_call_operand.vmem [shape: f32[16,32,128], index: 2, kind: output, shape index: {}]
  %s3 = sld [smem:[#allocation0]]
  $region45: #{mlp_jacobian_batched.1} parent=0
    _
  %s5 = ssub.s32 1, %s3
  %s6 = scalar_select 0, %s5, %s3
  $region1: #{mlp_jacobian_batched.1} parent=0
    #allocation2 [shape = 'u8[278528]{0}', space=vmem, size = 0x44000, scoped, tag = 'input window, operand 1, single buffered']
    #allocation3 [shape = 's32[2]{0}', space=sflag, size = 0x8, scoped, tag = 'scoped memory for mlp_jacobian_batched.1']
    %7 = vsyncpa [#allocation3], 0
    loop: start=0, step=1, limit=4
    $region2: #{mlp_jacobian_batched.1} parent=1 // loop_pre_header
      _
    $region3: #{mlp_jacobian_batched.1} parent=1 // loop_header
      %s9 = sphi 0, %s13
      %p10 = scmp.ge.s32.totalorder %s9, 4
      %s19 = sphi 0, %s21
      %s22 = sphi 0, %s19
      %s23 = sphi 0, %s22
      %s39 = sphi 0, %s23
      %s43 = sphi 0, %s43
      %s45 = sphi 0, %s43
      %s46 = sphi 0, %s45
      %s60 = sphi 0, %s46
      %s66 = sphi 0, %s68
      %s69 = sphi 0, %s66
      %s70 = sphi 0, %s69
      %s86 = sphi 0, %s70
    $region4: #{mlp_jacobian_batched.1} parent=1 // loop_header_branch
      %12 = sbr.rel (%p10) target = $region8
    $region5: #{mlp_jacobian_batched.1} parent=1 // loop_body
      %s14 = ssub.s32 %s9, 1
      %s15 = ssub.s32 %s9, 2
      %s16 = sadd.s32 %s9, 1
      %s17 = ssub.s32 %s9, %s16
      %p18 = scmp.eq.s32.totalorder %s17, 0
      %s20 = sadd.s32 %s19, 1
      %s21 = scalar_select %p18, %s19, %s20
      %p24 = pneg %p18
      %p25 = scmp.eq.s32.totalorder %s9, 1
      %p26 = por %p24, %p25
      %p27 = scmp.ne.s32.totalorder %s19, %s22
      %p28 = scmp.eq.s32.totalorder %s9, 0
      %p29 = por %p27, %p28
      %p30 = scmp.ne.s32.totalorder %s19, %s22
      %p31 = scmp.eq.s32.totalorder %s14, 1
      %p32 = por %p30, %p31
      %p33 = scmp.ne.s32.totalorder %s22, %s23
      %p34 = scmp.eq.s32.totalorder %s14, 0
      %p35 = por %p33, %p34
      %p36 = scmp.ne.s32.totalorder %s22, %s23
      %p37 = scmp.eq.s32.totalorder %s15, 1
      %p38 = por %p36, %p37
      %p40 = scmp.ne.s32.totalorder %s23, %s39
      %p41 = scmp.eq.s32.totalorder %s15, 0
      %p42 = por %p40, %p41
      %s44 = sadd.s32 %s43, 1
      %p47 = scmp.eq.s32.totalorder %s9, 1
      %p48 = scmp.ne.s32.totalorder %s43, %s45
      %p49 = scmp.eq.s32.totalorder %s9, 0
      %p50 = por %p48, %p49
      %p51 = scmp.ne.s32.totalorder %s43, %s45
      %p52 = scmp.eq.s32.totalorder %s14, 1
      %p53 = por %p51, %p52
      %p54 = scmp.ne.s32.totalorder %s45, %s46
      %p55 = scmp.eq.s32.totalorder %s14, 0
      %p56 = por %p54, %p55
      %p57 = scmp.ne.s32.totalorder %s45, %s46
      %p58 = scmp.eq.s32.totalorder %s15, 1
      %p59 = por %p57, %p58
      %p61 = scmp.ne.s32.totalorder %s46, %s60
      %p62 = scmp.eq.s32.totalorder %s15, 0
      %p63 = por %p61, %p62
      %s64 = ssub.s32 %s9, %s16
      %p65 = scmp.eq.s32.totalorder %s64, 0
      %s67 = sadd.s32 %s66, 1
      %s68 = scalar_select %p65, %s66, %s67
      %p71 = pneg %p65
      %p72 = scmp.eq.s32.totalorder %s9, 1
      %p73 = por %p71, %p72
      %p74 = scmp.ne.s32.totalorder %s66, %s69
      %p75 = scmp.eq.s32.totalorder %s9, 0
      %p76 = por %p74, %p75
      %p77 = scmp.ne.s32.totalorder %s66, %s69
      %p78 = scmp.eq.s32.totalorder %s14, 1
      %p79 = por %p77, %p78
      %p80 = scmp.ne.s32.totalorder %s69, %s70
      %p81 = scmp.eq.s32.totalorder %s14, 0
      %p82 = por %p80, %p81
      %p83 = scmp.ne.s32.totalorder %s69, %s70
      %p84 = scmp.eq.s32.totalorder %s15, 1
      %p85 = por %p83, %p84
      %p87 = scmp.ne.s32.totalorder %s70, %s86
      %p88 = scmp.eq.s32.totalorder %s15, 0
      %p89 = por %p87, %p88
      %p90 = scmp.le.s32.totalorder 1, %s9
      %p91 = scmp.lt.s32.totalorder %s9, 3
      %p92 = pnand %p90, %p91
      %p93 = pneg %p92
      // Predicated region
      $region9: #{mlp_jacobian_batched.1} parent=5 // pred_check
        _
      $region10: #{mlp_jacobian_batched.1} parent=5 // pred_check_branch
        %95 = sbr.rel (%p92) target = $region12
      $region11: #{mlp_jacobian_batched.1} parent=5 // pred_region
        %s96 = ssub.s32 %s9, 1
        // Predicated region
        $region13: #{mlp_jacobian_batched.1} parent=11 // pred_check
          %p97 = pneg %p56
        $region14: #{mlp_jacobian_batched.1} parent=11 // pred_check_branch
          %99 = sbr.rel (%p97) target = $region16
        $region15: #{mlp_jacobian_batched.1} parent=11 // pred_region
          %s101 = ssub.s32 8704, 8704
          %102 = vsyncadd [#allocation3], %s101
          %s103 = sshll.u32 [#allocation2], 4
          %s104 = int_to_ptr.vmem [resolvable:$true] %s103
          %109 = dma.hbm_to_vmem [thread:$0]  %s1, 8704, %s104, [#allocation3], 128, 128, 8
        $region16: #{mlp_jacobian_batched.1} parent=11 // pred_fallthru
          _
      $region12: #{mlp_jacobian_batched.1} parent=5 // pred_fallthru
        _
      %p110 = scmp.lt.s32.totalorder %s9, 2
      // Predicated region
      $region17: #{mlp_jacobian_batched.1} parent=5 // pred_check
        %p111 = pneg %p110
      $region18: #{mlp_jacobian_batched.1} parent=5 // pred_check_branch
        %113 = sbr.rel (%p111) target = $region20
      $region19: #{mlp_jacobian_batched.1} parent=5 // pred_region
        // Predicated region
        $region21: #{mlp_jacobian_batched.1} parent=19 // pred_check
          %p114 = pneg %p29
        $region22: #{mlp_jacobian_batched.1} parent=19 // pred_check_branch
          %116 = sbr.rel (%p114) target = $region24
        $region23: #{mlp_jacobian_batched.1} parent=19 // pred_region
          %p117 = scmp.lt.s32.totalorder %s9, 1
          %s118 = scalar_select %p117, %s9, 1
          %s119 = smul.addr %s118, 8
          %s120 = scalar_lea.vmem %s0, %s119
        $region24: #{mlp_jacobian_batched.1} parent=19 // pred_fallthru
          _
      $region20: #{mlp_jacobian_batched.1} parent=5 // pred_fallthru
        _
      %p121 = scmp.le.s32.totalorder 1, %s9
      %p122 = scmp.lt.s32.totalorder %s9, 3
      %p123 = pnand %p121, %p122
      %p124 = pneg %p123
      // Predicated region
      $region25: #{mlp_jacobian_batched.1} parent=5 // pred_check
        _
      $region26: #{mlp_jacobian_batched.1} parent=5 // pred_check_branch
        %126 = sbr.rel (%p123) target = $region28
      $region27: #{mlp_jacobian_batched.1} parent=5 // pred_region
        %s127 = ssub.s32 %s9, 1
        // Predicated region
        $region29: #{mlp_jacobian_batched.1} parent=27 // pred_check
          %p128 = pneg %p56
        $region30: #{mlp_jacobian_batched.1} parent=27 // pred_check_branch
          %130 = sbr.rel (%p128) target = $region32
        $region31: #{mlp_jacobian_batched.1} parent=27 // pred_region
          %131 = dma.done [#allocation3], 8704
        $region32: #{mlp_jacobian_batched.1} parent=27 // pred_fallthru
          _
        %p132 = scmp.lt.s32.totalorder %s14, 1
        %s133 = scalar_select %p132, %s14, 1
        %s134 = smul.addr %s133, 8
        %s135 = scalar_lea.vmem %s0, %s134
        %p136 = pneg %p35
        %p137 = pneg %p32
        %p138 = pneg %p56
        %p139 = pneg %p53
        %p140 = pneg %p82
        %p141 = pneg %p79
        %s142 = smul.u32 8, %s14
        %p143 = scmp.lt.s32.totalorder %s142, 15
        %s144 = scalar_select %p143, %s142, 15
        %s145 = smul.addr %s144, 4
        %s146 = smul.addr %s145, 8
        %s147 = scalar_lea.vmem %s2, %s146
        %p148 = scmp.lt.s32.totalorder %s14, 1
        %s149 = scalar_select %p148, %s14, 1
        %s150 = smul.addr %s149, 8
        %s151 = scalar_lea.vmem %s0, %s150
        %s152 = smul.u32 8, %s14
        %p153 = scmp.lt.s32.totalorder %s152, 15
        %s154 = scalar_select %p153, %s152, 15
        %s155 = smul.addr %s154, 4
        %s156 = smul.addr %s155, 8
        %s157 = scalar_lea.vmem %s2, %s156
        %s158 = smul.u32 8, %s14
        %v159 = vld [vmem:[#allocation2] sm:$0xff]
        %v160 = vld [vmem:[#allocation2 + $0x8] sm:$0xff]
        %v161 = vld [vmem:[#allocation2 + $0x10] sm:$0xff]
        %v162 = vld [vmem:[#allocation2 + $0x18] sm:$0xff]
        %v163 = vld [vmem:[#allocation2 + $0x20] sm:$0xff]
        %v164 = vld [vmem:[#allocation2 + $0x28] sm:$0xff]
        %v165 = vld [vmem:[#allocation2 + $0x30] sm:$0xff]
        %v166 = vld [vmem:[#allocation2 + $0x38] sm:$0xff]
        %v167 = vld [vmem:[#allocation2 + $0x40] sm:$0xff]
        %v168 = vld [vmem:[#allocation2 + $0x48] sm:$0xff]
        %v169 = vld [vmem:[#allocation2 + $0x50] sm:$0xff]
        %v170 = vld [vmem:[#allocation2 + $0x58] sm:$0xff]
        %v171 = vld [vmem:[#allocation2 + $0x60] sm:$0xff]
        %v172 = vld [vmem:[#allocation2 + $0x68] sm:$0xff]
        %v173 = vld [vmem:[#allocation2 + $0x70] sm:$0xff]
        %v174 = vld [vmem:[#allocation2 + $0x78] sm:$0xff]
        %v175 = vld [vmem:[#allocation2 + $0x80] sm:$0xff]
        %v176 = vld [vmem:[#allocation2 + $0x88] sm:$0xff]
        %v177 = vld [vmem:[#allocation2 + $0x90] sm:$0xff]
        %v178 = vld [vmem:[#allocation2 + $0x98] sm:$0xff]
        %v179 = vld [vmem:[#allocation2 + $0xa0] sm:$0xff]
        %v180 = vld [vmem:[#allocation2 + $0xa8] sm:$0xff]
        %v181 = vld [vmem:[#allocation2 + $0xb0] sm:$0xff]
        %v182 = vld [vmem:[#allocation2 + $0xb8] sm:$0xff]
        %v183 = vld [vmem:[#allocation2 + $0xc0] sm:$0xff]
        %v184 = vld [vmem:[#allocation2 + $0xc8] sm:$0xff]
        %v185 = vld [vmem:[#allocation2 + $0xd0] sm:$0xff]
        %v186 = vld [vmem:[#allocation2 + $0xd8] sm:$0xff]
        %v187 = vld [vmem:[#allocation2 + $0xe0] sm:$0xff]
        %v188 = vld [vmem:[#allocation2 + $0xe8] sm:$0xff]
        %v189 = vld [vmem:[#allocation2 + $0xf0] sm:$0xff]
        %v190 = vld [vmem:[#allocation2 + $0xf8] sm:$0xff]
        %v191 = vld [vmem:[#allocation2 + $0x100] sm:$0xff]
        %v192 = vld [vmem:[#allocation2 + $0x108] sm:$0xff]
        %v193 = vld [vmem:[#allocation2 + $0x110] sm:$0xff]
        %v194 = vld [vmem:[#allocation2 + $0x118] sm:$0xff]
        %v195 = vld [vmem:[#allocation2 + $0x120] sm:$0xff]
        %v196 = vld [vmem:[#allocation2 + $0x128] sm:$0xff]
        %v197 = vld [vmem:[#allocation2 + $0x130] sm:$0xff]
        %v198 = vld [vmem:[#allocation2 + $0x138] sm:$0xff]
        %v199 = vld [vmem:[#allocation2 + $0x140] sm:$0xff]
        %v200 = vld [vmem:[#allocation2 + $0x148] sm:$0xff]
        %v201 = vld [vmem:[#allocation2 + $0x150] sm:$0xff]
        %v202 = vld [vmem:[#allocation2 + $0x158] sm:$0xff]
        %v203 = vld [vmem:[#allocation2 + $0x160] sm:$0xff]
        %v204 = vld [vmem:[#allocation2 + $0x168] sm:$0xff]
        %v205 = vld [vmem:[#allocation2 + $0x170] sm:$0xff]
        %v206 = vld [vmem:[#allocation2 + $0x178] sm:$0xff]
        %v207 = vld [vmem:[#allocation2 + $0x180] sm:$0xff]
        %v208 = vld [vmem:[#allocation2 + $0x188] sm:$0xff]
        %v209 = vld [vmem:[#allocation2 + $0x190] sm:$0xff]
        %v210 = vld [vmem:[#allocation2 + $0x198] sm:$0xff]
        %v211 = vld [vmem:[#allocation2 + $0x1a0] sm:$0xff]
        %v212 = vld [vmem:[#allocation2 + $0x1a8] sm:$0xff]
        %v213 = vld [vmem:[#allocation2 + $0x1b0] sm:$0xff]
        %v214 = vld [vmem:[#allocation2 + $0x1b8] sm:$0xff]
        %v215 = vld [vmem:[#allocation2 + $0x1c0] sm:$0xff]
        %v216 = vld [vmem:[#allocation2 + $0x1c8] sm:$0xff]
        %v217 = vld [vmem:[#allocation2 + $0x1d0] sm:$0xff]
        %v218 = vld [vmem:[#allocation2 + $0x1d8] sm:$0xff]
        %v219 = vld [vmem:[#allocation2 + $0x1e0] sm:$0xff]
        %v220 = vld [vmem:[#allocation2 + $0x1e8] sm:$0xff]
        %v221 = vld [vmem:[#allocation2 + $0x1f0] sm:$0xff]
        %v222 = vld [vmem:[#allocation2 + $0x1f8] sm:$0xff]
        %v223 = vld [vmem:[#allocation2 + $0x200] sm:$0xff]
        %v224 = vld [vmem:[#allocation2 + $0x208] sm:$0xff]
        %v225 = vld [vmem:[#allocation2 + $0x210] sm:$0xff]
        %v226 = vld [vmem:[#allocation2 + $0x218] sm:$0xff]
        %v227 = vld [vmem:[%s151] sm:$0xff]
        %228 = vmatprep.subr.mxu0 0.0
        %229 = vmatpush1.msra.mxu0 %v159
        %230 = vmatprep.subr.mxu0 0.0
        %231 = vmatpush1.msra.mxu0 %v160
        %232 = vmatprep.subr.mxu0 0.0
        %233 = vmatpush1.msra.mxu0 %v161
        %234 = vmatprep.subr.mxu0 0.0
        %235 = vmatpush1.msra.mxu0 %v162
        %236 = vmatprep.subr.mxu0 0.0
        %237 = vmatpush1.msra.mxu0 %v163
        %238 = vmatprep.subr.mxu0 0.0
        %239 = vmatpush1.msra.mxu0 %v164
        %240 = vmatprep.subr.mxu0 0.0
        %241 = vmatpush1.msra.mxu0 %v165
        %242 = vmatprep.subr.mxu0 0.0
        %243 = vmatpush1.msra.mxu0 %v166
        %244 = vmatprep.subr.mxu0 0.0
        %245 = vmatpush1.msra.mxu0 %v167
        %246 = vmatprep.subr.mxu0 0.0
        %247 = vmatpush1.msra.mxu0 %v168
        %248 = vmatprep.subr.mxu0 0.0
        %249 = vmatpush1.msra.mxu0 %v169
        %250 = vmatprep.subr.mxu0 0.0
        %251 = vmatpush1.msra.mxu0 %v170
        %252 = vmatprep.subr.mxu0 0.0
        %253 = vmatpush1.msra.mxu0 %v171
        %254 = vmatprep.subr.mxu0 0.0
        %255 = vmatpush1.msra.mxu0 %v172
        %256 = vmatprep.subr.mxu0 0.0
        %257 = vmatpush1.msra.mxu0 %v173
        %258 = vmatprep.subr.mxu0 0.0
        %259 = vmatpush1.msra.mxu0 %v174
        %260 = vmatprep.subr.mxu0 0.0
        %261 = vmatpush1.msra.mxu0 0.0
        %262 = vmatprep.subr.mxu0 0.0
        %263 = vmatpush1.msra.mxu0 0.0
        %264 = vmatprep.subr.mxu0 0.0
        %265 = vmatpush1.msra.mxu0 0.0
        %266 = vmatprep.subr.mxu0 0.0
        %267 = vmatpush1.msra.mxu0 0.0
        %268 = vmatprep.subr.mxu0 0.0
        %269 = vmatpush1.msra.mxu0 0.0
        %270 = vmatprep.subr.mxu0 0.0
        %271 = vmatpush1.msra.mxu0 0.0
        %272 = vmatprep.subr.mxu0 0.0
        %273 = vmatpush1.msra.mxu0 0.0
        %274 = vmatprep.subr.mxu0 0.0
        %275 = vmatpush1.msra.mxu0 0.0
        %276 = vmatprep.subr.mxu0 0.0
        %277 = vmatpush1.msra.mxu0 0.0
        %278 = vmatprep.subr.mxu0 0.0
        %279 = vmatpush1.msra.mxu0 0.0
        %280 = vmatprep.subr.mxu0 0.0
        %281 = vmatpush1.msra.mxu0 0.0
        %282 = vmatprep.subr.mxu0 0.0
        %283 = vmatpush1.msra.mxu0 0.0
        %284 = vmatprep.subr.mxu0 0.0
        %285 = vmatpush1.msra.mxu0 0.0
        %286 = vmatprep.subr.mxu0 0.0
        %287 = vmatpush1.msra.mxu0 0.0
        %288 = vmatprep.subr.mxu0 0.0
        %289 = vmatpush1.msra.mxu0 0.0
        %290 = vmatprep.subr.mxu0 0.0
        %291 = vmatpush1.msra.mxu0 0.0
        %292 = vmatprep.mubr.f32.mxu0 0.0
        %293 = vmatmul.mubr.f32.gmra.mrb[0].mxu0 %v227
        %v294 = vpop.f32.mrb[0].mxu0
        %v295 = vadd.f32 0.0, %v294
        %v296 = vpop.f32.mrb[0].mxu0
        %297 = vdwg.mxu0
        %v298 = vmax.f32 %v295, 0.0
        %299 = vmatprep.subr.mxu0 0.0
        %300 = vmatpush1.msra.mxu0 %v175
        %301 = vmatprep.subr.mxu0 0.0
        %302 = vmatpush1.msra.mxu0 %v176
        %303 = vmatprep.subr.mxu0 0.0
        %304 = vmatpush1.msra.mxu0 %v177
        %305 = vmatprep.subr.mxu0 0.0
        %306 = vmatpush1.msra.mxu0 %v178
        %307 = vmatprep.subr.mxu0 0.0
        %308 = vmatpush1.msra.mxu0 %v179
        %309 = vmatprep.subr.mxu0 0.0
        %310 = vmatpush1.msra.mxu0 %v180
        %311 = vmatprep.subr.mxu0 0.0
        %312 = vmatpush1.msra.mxu0 %v181
        %313 = vmatprep.subr.mxu0 0.0
        %314 = vmatpush1.msra.mxu0 %v182
        %315 = vmatprep.subr.mxu0 0.0
        %316 = vmatpush1.msra.mxu0 %v183
        %317 = vmatprep.subr.mxu0 0.0
        %318 = vmatpush1.msra.mxu0 %v184
        %319 = vmatprep.subr.mxu0 0.0
        %320 = vmatpush1.msra.mxu0 %v185
        %321 = vmatprep.subr.mxu0 0.0
        %322 = vmatpush1.msra.mxu0 %v186
        %323 = vmatprep.subr.mxu0 0.0
        %324 = vmatpush1.msra.mxu0 %v187
        %325 = vmatprep.subr.mxu0 0.0
        %326 = vmatpush1.msra.mxu0 %v188
        %327 = vmatprep.subr.mxu0 0.0
        %328 = vmatpush1.msra.mxu0 %v189
        %329 = vmatprep.subr.mxu0 0.0
        %330 = vmatpush1.msra.mxu0 %v190
        %331 = vmatprep.subr.mxu0 0.0
        %332 = vmatpush1.msra.mxu0 0.0
        %333 = vmatprep.subr.mxu0 0.0
        %334 = vmatpush1.msra.mxu0 0.0
        %335 = vmatprep.subr.mxu0 0.0
        %336 = vmatpush1.msra.mxu0 0.0
        %337 = vmatprep.subr.mxu0 0.0
        %338 = vmatpush1.msra.mxu0 0.0
        %339 = vmatprep.subr.mxu0 0.0
        %340 = vmatpush1.msra.mxu0 0.0
        %341 = vmatprep.subr.mxu0 0.0
        %342 = vmatpush1.msra.mxu0 0.0
        %343 = vmatprep.subr.mxu0 0.0
        %344 = vmatpush1.msra.mxu0 0.0
        %345 = vmatprep.subr.mxu0 0.0
        %346 = vmatpush1.msra.mxu0 0.0
        %347 = vmatprep.subr.mxu0 0.0
        %348 = vmatpush1.msra.mxu0 0.0
        %349 = vmatprep.subr.mxu0 0.0
        %350 = vmatpush1.msra.mxu0 0.0
        %351 = vmatprep.subr.mxu0 0.0
        %352 = vmatpush1.msra.mxu0 0.0
        %353 = vmatprep.subr.mxu0 0.0
        %354 = vmatpush1.msra.mxu0 0.0
        %355 = vmatprep.subr.mxu0 0.0
        %356 = vmatpush1.msra.mxu0 0.0
        %357 = vmatprep.subr.mxu0 0.0
        %358 = vmatpush1.msra.mxu0 0.0
        %359 = vmatprep.subr.mxu0 0.0
        %360 = vmatpush1.msra.mxu0 0.0
        %361 = vmatprep.subr.mxu0 0.0
        %362 = vmatpush1.msra.mxu0 0.0
        %363 = vmatprep.mubr.f32.mxu0 0.0
        %364 = vmatmul.mubr.f32.gmra.mrb[0].mxu0 %v298
        %v365 = vpop.f32.mrb[0].mxu0
        %v366 = vadd.f32 0.0, %v365
        %v367 = vpop.f32.mrb[0].mxu0
        %368 = vdwg.mxu0
        %v369 = vmax.f32 %v366, 0.0
        %vm370 = vcmp.gt.f32.partialorder %v298, 0.0
        %v371 = vsel %vm370, 1, 0
        %v372 = vcvt.s32.f32 %v371
        %vm373 = vcmp.gt.f32.partialorder %v369, 0.0
        %v374 = vsel %vm373, 1, 0
        %v375 = vcvt.s32.f32 %v374
        %v377 = vcombine.high %v375, %v375
        %v379 = vunpack.c.l.s4 1966171168
        %v380 = vunpack.c.0.s8 %v379
        %v381 = vlaneseq
        %v382 = vshrl.u32 %v381, 7
        %v383 = vsub.s32 %v380, %v382
        %v384 = vrot.slane %v375, %v383
        %v386 = vunpack.c.l.s4 1966171168
        %v387 = vunpack.c.0.s8 %v386
        %v388 = vlaneseq
        %v389 = vshrl.u32 %v388, 7
        %v390 = vsub.s32 %v387, %v389
        %v391 = vrot.slane %v377, %v390
        %v392 = vcombine.high %v384, %v384
        %v393 = vcombine.high %v391, %v391
        %v395 = vunpack.c.l.s4 1966171168
        %v396 = vunpack.c.0.s8 %v395
        %v397 = vlaneseq
        %v398 = vshrl.u32 %v397, 7
        %v399 = vsub.s32 %v396, %v398
        %v400 = vrot.slane %v384, %v399
        %v402 = vunpack.c.l.s4 1966171168
        %v403 = vunpack.c.0.s8 %v402
        %v404 = vlaneseq
        %v405 = vshrl.u32 %v404, 7
        %v406 = vsub.s32 %v403, %v405
        %v407 = vrot.slane %v391, %v406
        %v409 = vunpack.c.l.s4 1966171168
        %v410 = vunpack.c.0.s8 %v409
        %v411 = vlaneseq
        %v412 = vshrl.u32 %v411, 7
        %v413 = vsub.s32 %v410, %v412
        %v414 = vrot.slane %v392, %v413
        %v416 = vunpack.c.l.s4 1966171168
        %v417 = vunpack.c.0.s8 %v416
        %v418 = vlaneseq
        %v419 = vshrl.u32 %v418, 7
        %v420 = vsub.s32 %v417, %v419
        %v421 = vrot.slane %v393, %v420
        %v422 = vcombine.high %v400, %v400
        %v423 = vcombine.high %v407, %v407
        %v424 = vcombine.high %v414, %v414
        %v425 = vcombine.high %v421, %v421
        %v426 = vlaneseq
        %v427 = vshrl.u32 %v426, 7
        %v428 = vsub.s32 0, %v427
        %v429 = vrot.slane %v400, %v428
        %v430 = vlaneseq
        %v431 = vshrl.u32 %v430, 7
        %v432 = vsub.s32 0, %v431
        %v433 = vrot.slane %v414, %v432
        %v434 = vlaneseq
        %v435 = vshrl.u32 %v434, 7
        %v436 = vsub.s32 0, %v435
        %v437 = vrot.slane %v422, %v436
        %v438 = vlaneseq
        %v439 = vshrl.u32 %v438, 7
        %v440 = vsub.s32 0, %v439
        %v441 = vrot.slane %v424, %v440
        %v442 = vlaneseq
        %v443 = vshrl.u32 %v442, 7
        %v444 = vsub.s32 0, %v443
        %v445 = vrot.slane %v407, %v444
        %v446 = vlaneseq
        %v447 = vshrl.u32 %v446, 7
        %v448 = vsub.s32 0, %v447
        %v449 = vrot.slane %v421, %v448
        %v450 = vlaneseq
        %v451 = vshrl.u32 %v450, 7
        %v452 = vsub.s32 0, %v451
        %v453 = vrot.slane %v423, %v452
        %v454 = vlaneseq
        %v455 = vshrl.u32 %v454, 7
        %v456 = vsub.s32 0, %v455
        %v457 = vrot.slane %v425, %v456
        %v466 = vmul.f32 %v191, %v429
        %v467 = vmul.f32 %v192, %v429
        %v468 = vmul.f32 %v193, %v429
        %v469 = vmul.f32 %v194, %v429
        %v470 = vmul.f32 %v191, %v433
        %v471 = vmul.f32 %v192, %v433
        %v472 = vmul.f32 %v193, %v433
        %v473 = vmul.f32 %v194, %v433
        %v474 = vmul.f32 %v191, %v437
        %v475 = vmul.f32 %v192, %v437
        %v476 = vmul.f32 %v193, %v437
        %v477 = vmul.f32 %v194, %v437
        %v478 = vmul.f32 %v191, %v441
        %v479 = vmul.f32 %v192, %v441
        %v480 = vmul.f32 %v193, %v441
        %v481 = vmul.f32 %v194, %v441
        %v482 = vmul.f32 %v191, %v445
        %v483 = vmul.f32 %v192, %v445
        %v484 = vmul.f32 %v193, %v445
        %v485 = vmul.f32 %v194, %v445
        %v486 = vmul.f32 %v191, %v449
        %v487 = vmul.f32 %v192, %v449
        %v488 = vmul.f32 %v193, %v449
        %v489 = vmul.f32 %v194, %v449
        %v490 = vmul.f32 %v191, %v453
        %v491 = vmul.f32 %v192, %v453
        %v492 = vmul.f32 %v193, %v453
        %v493 = vmul.f32 %v194, %v453
        %v494 = vmul.f32 %v191, %v457
        %v495 = vmul.f32 %v192, %v457
        %v496 = vmul.f32 %v193, %v457
        %v497 = vmul.f32 %v194, %v457
        %498 = vmatprep.subr.mxu0 0.0
        %499 = vmatpush1.msra.mxu0 %v195
        %500 = vmatprep.subr.mxu0 0.0
        %501 = vmatpush1.msra.mxu0 %v196
        %502 = vmatprep.subr.mxu0 0.0
        %503 = vmatpush1.msra.mxu0 %v197
        %504 = vmatprep.subr.mxu0 0.0
        %505 = vmatpush1.msra.mxu0 %v198
        %506 = vmatprep.subr.mxu0 0.0
        %507 = vmatpush1.msra.mxu0 %v199
        %508 = vmatprep.subr.mxu0 0.0
        %509 = vmatpush1.msra.mxu0 %v200
        %510 = vmatprep.subr.mxu0 0.0
        %511 = vmatpush1.msra.mxu0 %v201
        %512 = vmatprep.subr.mxu0 0.0
        %513 = vmatpush1.msra.mxu0 %v202
        %514 = vmatprep.subr.mxu0 0.0
        %515 = vmatpush1.msra.mxu0 %v203
        %516 = vmatprep.subr.mxu0 0.0
        %517 = vmatpush1.msra.mxu0 %v204
        %518 = vmatprep.subr.mxu0 0.0
        %519 = vmatpush1.msra.mxu0 %v205
        %520 = vmatprep.subr.mxu0 0.0
        %521 = vmatpush1.msra.mxu0 %v206
        %522 = vmatprep.subr.mxu0 0.0
        %523 = vmatpush1.msra.mxu0 %v207
        %524 = vmatprep.subr.mxu0 0.0
        %525 = vmatpush1.msra.mxu0 %v208
        %526 = vmatprep.subr.mxu0 0.0
        %527 = vmatpush1.msra.mxu0 %v209
        %528 = vmatprep.subr.mxu0 0.0
        %529 = vmatpush1.msra.mxu0 %v210
        %530 = vmatprep.subr.mxu0 0.0
        %531 = vmatpush1.msra.mxu0 0.0
        %532 = vmatprep.subr.mxu0 0.0
        %533 = vmatpush1.msra.mxu0 0.0
        %534 = vmatprep.subr.mxu0 0.0
        %535 = vmatpush1.msra.mxu0 0.0
        %536 = vmatprep.subr.mxu0 0.0
        %537 = vmatpush1.msra.mxu0 0.0
        %538 = vmatprep.subr.mxu0 0.0
        %539 = vmatpush1.msra.mxu0 0.0
        %540 = vmatprep.subr.mxu0 0.0
        %541 = vmatpush1.msra.mxu0 0.0
        %542 = vmatprep.subr.mxu0 0.0
        %543 = vmatpush1.msra.mxu0 0.0
        %544 = vmatprep.subr.mxu0 0.0
        %545 = vmatpush1.msra.mxu0 0.0
        %546 = vmatprep.subr.mxu0 0.0
        %547 = vmatpush1.msra.mxu0 0.0
        %548 = vmatprep.subr.mxu0 0.0
        %549 = vmatpush1.msra.mxu0 0.0
        %550 = vmatprep.subr.mxu0 0.0
        %551 = vmatpush1.msra.mxu0 0.0
        %552 = vmatprep.subr.mxu0 0.0
        %553 = vmatpush1.msra.mxu0 0.0
        %554 = vmatprep.subr.mxu0 0.0
        %555 = vmatpush1.msra.mxu0 0.0
        %556 = vmatprep.subr.mxu0 0.0
        %557 = vmatpush1.msra.mxu0 0.0
        %558 = vmatprep.subr.mxu0 0.0
        %559 = vmatpush1.msra.mxu0 0.0
        %560 = vmatprep.subr.mxu0 0.0
        %561 = vmatpush1.msra.mxu0 0.0
        %562 = vmatprep.mubr.f32.mxu0 0.0
        %563 = vmatmul.mubr.f32.gmra.mrb[0].mxu0 %v466
        %v564 = vpop.f32.mrb[0].mxu0
        %v565 = vadd.f32 0.0, %v564
        %v566 = vpop.f32.mrb[0].mxu0
        %567 = vmatprep.mubr.f32.mxu0 0.0
        %568 = vmatmul.mubr.f32.gmra.mrb[0].mxu0 %v467
        %v569 = vpop.f32.mrb[0].mxu0
        %v570 = vadd.f32 0.0, %v569
        %v571 = vpop.f32.mrb[0].mxu0
        %572 = vmatprep.mubr.f32.mxu0 0.0
        %573 = vmatmul.mubr.f32.gmra.mrb[0].mxu0 %v468
        %v574 = vpop.f32.mrb[0].mxu0
        %v575 = vadd.f32 0.0, %v574
        %v576 = vpop.f32.mrb[0].mxu0
        %577 = vmatprep.mubr.f32.mxu0 0.0
        %578 = vmatmul.mubr.f32.gmra.mrb[0].mxu0 %v469
        %v579 = vpop.f32.mrb[0].mxu0
        %v580 = vadd.f32 0.0, %v579
        %v581 = vpop.f32.mrb[0].mxu0
        %582 = vmatprep.mubr.f32.mxu0 0.0
        %583 = vmatmul.mubr.f32.gmra.mrb[0].mxu0 %v470
        %v584 = vpop.f32.mrb[0].mxu0
        %v585 = vadd.f32 0.0, %v584
        %v586 = vpop.f32.mrb[0].mxu0
        %587 = vmatprep.mubr.f32.mxu0 0.0
        %588 = vmatmul.mubr.f32.gmra.mrb[0].mxu0 %v471
        %v589 = vpop.f32.mrb[0].mxu0
        %v590 = vadd.f32 0.0, %v589
        %v591 = vpop.f32.mrb[0].mxu0
        %592 = vmatprep.mubr.f32.mxu0 0.0
        %593 = vmatmul.mubr.f32.gmra.mrb[0].mxu0 %v472
        %v594 = vpop.f32.mrb[0].mxu0
        %v595 = vadd.f32 0.0, %v594
        %v596 = vpop.f32.mrb[0].mxu0
        %597 = vmatprep.mubr.f32.mxu0 0.0
        %598 = vmatmul.mubr.f32.gmra.mrb[0].mxu0 %v473
        %v599 = vpop.f32.mrb[0].mxu0
        %v600 = vadd.f32 0.0, %v599
        %v601 = vpop.f32.mrb[0].mxu0
        %602 = vmatprep.mubr.f32.mxu0 0.0
        %603 = vmatmul.mubr.f32.gmra.mrb[0].mxu0 %v474
        %v604 = vpop.f32.mrb[0].mxu0
        %v605 = vadd.f32 0.0, %v604
        %v606 = vpop.f32.mrb[0].mxu0
        %607 = vmatprep.mubr.f32.mxu0 0.0
        %608 = vmatmul.mubr.f32.gmra.mrb[0].mxu0 %v475
        %v609 = vpop.f32.mrb[0].mxu0
        %v610 = vadd.f32 0.0, %v609
        %v611 = vpop.f32.mrb[0].mxu0
        %612 = vmatprep.mubr.f32.mxu0 0.0
        %613 = vmatmul.mubr.f32.gmra.mrb[0].mxu0 %v476
        %v614 = vpop.f32.mrb[0].mxu0
        %v615 = vadd.f32 0.0, %v614
        %v616 = vpop.f32.mrb[0].mxu0
        %617 = vmatprep.mubr.f32.mxu0 0.0
        %618 = vmatmul.mubr.f32.gmra.mrb[0].mxu0 %v477
        %v619 = vpop.f32.mrb[0].mxu0
        %v620 = vadd.f32 0.0, %v619
        %v621 = vpop.f32.mrb[0].mxu0
        %622 = vmatprep.mubr.f32.mxu0 0.0
        %623 = vmatmul.mubr.f32.gmra.mrb[0].mxu0 %v478
        %v624 = vpop.f32.mrb[0].mxu0
        %v625 = vadd.f32 0.0, %v624
        %v626 = vpop.f32.mrb[0].mxu0
        %627 = vmatprep.mubr.f32.mxu0 0.0
        %628 = vmatmul.mubr.f32.gmra.mrb[0].mxu0 %v479
        %v629 = vpop.f32.mrb[0].mxu0
        %v630 = vadd.f32 0.0, %v629
        %v631 = vpop.f32.mrb[0].mxu0
        %632 = vmatprep.mubr.f32.mxu0 0.0
        %633 = vmatmul.mubr.f32.gmra.mrb[0].mxu0 %v480
        %v634 = vpop.f32.mrb[0].mxu0
        %v635 = vadd.f32 0.0, %v634
        %v636 = vpop.f32.mrb[0].mxu0
        %637 = vmatprep.mubr.f32.mxu0 0.0
        %638 = vmatmul.mubr.f32.gmra.mrb[0].mxu0 %v481
        %v639 = vpop.f32.mrb[0].mxu0
        %v640 = vadd.f32 0.0, %v639
        %v641 = vpop.f32.mrb[0].mxu0
        %642 = vmatprep.mubr.f32.mxu0 0.0
        %643 = vmatmul.mubr.f32.gmra.mrb[0].mxu0 %v482
        %v644 = vpop.f32.mrb[0].mxu0
        %v645 = vadd.f32 0.0, %v644
        %v646 = vpop.f32.mrb[0].mxu0
        %647 = vmatprep.mubr.f32.mxu0 0.0
        %648 = vmatmul.mubr.f32.gmra.mrb[0].mxu0 %v483
        %v649 = vpop.f32.mrb[0].mxu0
        %v650 = vadd.f32 0.0, %v649
        %v651 = vpop.f32.mrb[0].mxu0
        %652 = vmatprep.mubr.f32.mxu0 0.0
        %653 = vmatmul.mubr.f32.gmra.mrb[0].mxu0 %v484
        %v654 = vpop.f32.mrb[0].mxu0
        %v655 = vadd.f32 0.0, %v654
        %v656 = vpop.f32.mrb[0].mxu0
        %657 = vmatprep.mubr.f32.mxu0 0.0
        %658 = vmatmul.mubr.f32.gmra.mrb[0].mxu0 %v485
        %v659 = vpop.f32.mrb[0].mxu0
        %v660 = vadd.f32 0.0, %v659
        %v661 = vpop.f32.mrb[0].mxu0
        %662 = vmatprep.mubr.f32.mxu0 0.0
        %663 = vmatmul.mubr.f32.gmra.mrb[0].mxu0 %v486
        %v664 = vpop.f32.mrb[0].mxu0
        %v665 = vadd.f32 0.0, %v664
        %v666 = vpop.f32.mrb[0].mxu0
        %667 = vmatprep.mubr.f32.mxu0 0.0
        %668 = vmatmul.mubr.f32.gmra.mrb[0].mxu0 %v487
        %v669 = vpop.f32.mrb[0].mxu0
        %v670 = vadd.f32 0.0, %v669
        %v671 = vpop.f32.mrb[0].mxu0
        %672 = vmatprep.mubr.f32.mxu0 0.0
        %673 = vmatmul.mubr.f32.gmra.mrb[0].mxu0 %v488
        %v674 = vpop.f32.mrb[0].mxu0
        %v675 = vadd.f32 0.0, %v674
        %v676 = vpop.f32.mrb[0].mxu0
        %677 = vmatprep.mubr.f32.mxu0 0.0
        %678 = vmatmul.mubr.f32.gmra.mrb[0].mxu0 %v489
        %v679 = vpop.f32.mrb[0].mxu0
        %v680 = vadd.f32 0.0, %v679
        %v681 = vpop.f32.mrb[0].mxu0
        %682 = vmatprep.mubr.f32.mxu0 0.0
        %683 = vmatmul.mubr.f32.gmra.mrb[0].mxu0 %v490
        %v684 = vpop.f32.mrb[0].mxu0
        %v685 = vadd.f32 0.0, %v684
        %v686 = vpop.f32.mrb[0].mxu0
        %687 = vmatprep.mubr.f32.mxu0 0.0
        %688 = vmatmul.mubr.f32.gmra.mrb[0].mxu0 %v491
        %v689 = vpop.f32.mrb[0].mxu0
        %v690 = vadd.f32 0.0, %v689
        %v691 = vpop.f32.mrb[0].mxu0
        %692 = vmatprep.mubr.f32.mxu0 0.0
        %693 = vmatmul.mubr.f32.gmra.mrb[0].mxu0 %v492
        %v694 = vpop.f32.mrb[0].mxu0
        %v695 = vadd.f32 0.0, %v694
        %v696 = vpop.f32.mrb[0].mxu0
        %697 = vmatprep.mubr.f32.mxu0 0.0
        %698 = vmatmul.mubr.f32.gmra.mrb[0].mxu0 %v493
        %v699 = vpop.f32.mrb[0].mxu0
        %v700 = vadd.f32 0.0, %v699
        %v701 = vpop.f32.mrb[0].mxu0
        %702 = vmatprep.mubr.f32.mxu0 0.0
        %703 = vmatmul.mubr.f32.gmra.mrb[0].mxu0 %v494
        %v704 = vpop.f32.mrb[0].mxu0
        %v705 = vadd.f32 0.0, %v704
        %v706 = vpop.f32.mrb[0].mxu0
        %707 = vmatprep.mubr.f32.mxu0 0.0
        %708 = vmatmul.mubr.f32.gmra.mrb[0].mxu0 %v495
        %v709 = vpop.f32.mrb[0].mxu0
        %v710 = vadd.f32 0.0, %v709
        %v711 = vpop.f32.mrb[0].mxu0
        %712 = vmatprep.mubr.f32.mxu0 0.0
        %713 = vmatmul.mubr.f32.gmra.mrb[0].mxu0 %v496
        %v714 = vpop.f32.mrb[0].mxu0
        %v715 = vadd.f32 0.0, %v714
        %v716 = vpop.f32.mrb[0].mxu0
        %717 = vmatprep.mubr.f32.mxu0 0.0
        %718 = vmatmul.mubr.f32.gmra.mrb[0].mxu0 %v497
        %v719 = vpop.f32.mrb[0].mxu0
        %v720 = vadd.f32 0.0, %v719
        %v721 = vpop.f32.mrb[0].mxu0
        %722 = vdwg.mxu0
        %v724 = vcombine.high %v372, %v372
        %v726 = vunpack.c.l.s4 1966171168
        %v727 = vunpack.c.0.s8 %v726
        %v728 = vlaneseq
        %v729 = vshrl.u32 %v728, 7
        %v730 = vsub.s32 %v727, %v729
        %v731 = vrot.slane %v372, %v730
        %v733 = vunpack.c.l.s4 1966171168
        %v734 = vunpack.c.0.s8 %v733
        %v735 = vlaneseq
        %v736 = vshrl.u32 %v735, 7
        %v737 = vsub.s32 %v734, %v736
        %v738 = vrot.slane %v724, %v737
        %v739 = vcombine.high %v731, %v731
        %v740 = vcombine.high %v738, %v738
        %v742 = vunpack.c.l.s4 1966171168
        %v743 = vunpack.c.0.s8 %v742
        %v744 = vlaneseq
        %v745 = vshrl.u32 %v744, 7
        %v746 = vsub.s32 %v743, %v745
        %v747 = vrot.slane %v731, %v746
        %v749 = vunpack.c.l.s4 1966171168
        %v750 = vunpack.c.0.s8 %v749
        %v751 = vlaneseq
        %v752 = vshrl.u32 %v751, 7
        %v753 = vsub.s32 %v750, %v752
        %v754 = vrot.slane %v738, %v753
        %v756 = vunpack.c.l.s4 1966171168
        %v757 = vunpack.c.0.s8 %v756
        %v758 = vlaneseq
        %v759 = vshrl.u32 %v758, 7
        %v760 = vsub.s32 %v757, %v759
        %v761 = vrot.slane %v739, %v760
        %v763 = vunpack.c.l.s4 1966171168
        %v764 = vunpack.c.0.s8 %v763
        %v765 = vlaneseq
        %v766 = vshrl.u32 %v765, 7
        %v767 = vsub.s32 %v764, %v766
        %v768 = vrot.slane %v740, %v767
        %v769 = vcombine.high %v747, %v747
        %v770 = vcombine.high %v754, %v754
        %v771 = vcombine.high %v761, %v761
        %v772 = vcombine.high %v768, %v768
        %v773 = vlaneseq
        %v774 = vshrl.u32 %v773, 7
        %v775 = vsub.s32 0, %v774
        %v776 = vrot.slane %v747, %v775
        %v777 = vlaneseq
        %v778 = vshrl.u32 %v777, 7
        %v779 = vsub.s32 0, %v778
        %v780 = vrot.slane %v761, %v779
        %v781 = vlaneseq
        %v782 = vshrl.u32 %v781, 7
        %v783 = vsub.s32 0, %v782
        %v784 = vrot.slane %v769, %v783
        %v785 = vlaneseq
        %v786 = vshrl.u32 %v785, 7
        %v787 = vsub.s32 0, %v786
        %v788 = vrot.slane %v771, %v787
        %v789 = vlaneseq
        %v790 = vshrl.u32 %v789, 7
        %v791 = vsub.s32 0, %v790
        %v792 = vrot.slane %v754, %v791
        %v793 = vlaneseq
        %v794 = vshrl.u32 %v793, 7
        %v795 = vsub.s32 0, %v794
        %v796 = vrot.slane %v768, %v795
        %v797 = vlaneseq
        %v798 = vshrl.u32 %v797, 7
        %v799 = vsub.s32 0, %v798
        %v800 = vrot.slane %v770, %v799
        %v801 = vlaneseq
        %v802 = vshrl.u32 %v801, 7
        %v803 = vsub.s32 0, %v802
        %v804 = vrot.slane %v772, %v803
        %v813 = vmul.f32 %v565, %v776
        %v814 = vmul.f32 %v570, %v776
        %v815 = vmul.f32 %v575, %v776
        %v816 = vmul.f32 %v580, %v776
        %v817 = vmul.f32 %v585, %v780
        %v818 = vmul.f32 %v590, %v780
        %v819 = vmul.f32 %v595, %v780
        %v820 = vmul.f32 %v600, %v780
        %v821 = vmul.f32 %v605, %v784
        %v822 = vmul.f32 %v610, %v784
        %v823 = vmul.f32 %v615, %v784
        %v824 = vmul.f32 %v620, %v784
        %v825 = vmul.f32 %v625, %v788
        %v826 = vmul.f32 %v630, %v788
        %v827 = vmul.f32 %v635, %v788
        %v828 = vmul.f32 %v640, %v788
        %v829 = vmul.f32 %v645, %v792
        %v830 = vmul.f32 %v650, %v792
        %v831 = vmul.f32 %v655, %v792
        %v832 = vmul.f32 %v660, %v792
        %v833 = vmul.f32 %v665, %v796
        %v834 = vmul.f32 %v670, %v796
        %v835 = vmul.f32 %v675, %v796
        %v836 = vmul.f32 %v680, %v796
        %v837 = vmul.f32 %v685, %v800
        %v838 = vmul.f32 %v690, %v800
        %v839 = vmul.f32 %v695, %v800
        %v840 = vmul.f32 %v700, %v800
        %v841 = vmul.f32 %v705, %v804
        %v842 = vmul.f32 %v710, %v804
        %v843 = vmul.f32 %v715, %v804
        %v844 = vmul.f32 %v720, %v804
        %845 = vmatprep.subr.mxu0 0.0
        %846 = vmatpush1.msra.mxu0 %v211
        %847 = vmatprep.subr.mxu0 0.0
        %848 = vmatpush1.msra.mxu0 %v212
        %849 = vmatprep.subr.mxu0 0.0
        %850 = vmatpush1.msra.mxu0 %v213
        %851 = vmatprep.subr.mxu0 0.0
        %852 = vmatpush1.msra.mxu0 %v214
        %853 = vmatprep.subr.mxu0 0.0
        %854 = vmatpush1.msra.mxu0 %v215
        %855 = vmatprep.subr.mxu0 0.0
        %856 = vmatpush1.msra.mxu0 %v216
        %857 = vmatprep.subr.mxu0 0.0
        %858 = vmatpush1.msra.mxu0 %v217
        %859 = vmatprep.subr.mxu0 0.0
        %860 = vmatpush1.msra.mxu0 %v218
        %861 = vmatprep.subr.mxu0 0.0
        %862 = vmatpush1.msra.mxu0 %v219
        %863 = vmatprep.subr.mxu0 0.0
        %864 = vmatpush1.msra.mxu0 %v220
        %865 = vmatprep.subr.mxu0 0.0
        %866 = vmatpush1.msra.mxu0 %v221
        %867 = vmatprep.subr.mxu0 0.0
        %868 = vmatpush1.msra.mxu0 %v222
        %869 = vmatprep.subr.mxu0 0.0
        %870 = vmatpush1.msra.mxu0 %v223
        %871 = vmatprep.subr.mxu0 0.0
        %872 = vmatpush1.msra.mxu0 %v224
        %873 = vmatprep.subr.mxu0 0.0
        %874 = vmatpush1.msra.mxu0 %v225
        %875 = vmatprep.subr.mxu0 0.0
        %876 = vmatpush1.msra.mxu0 %v226
        %877 = vmatprep.subr.mxu0 0.0
        %878 = vmatpush1.msra.mxu0 0.0
        %879 = vmatprep.subr.mxu0 0.0
        %880 = vmatpush1.msra.mxu0 0.0
        %881 = vmatprep.subr.mxu0 0.0
        %882 = vmatpush1.msra.mxu0 0.0
        %883 = vmatprep.subr.mxu0 0.0
        %884 = vmatpush1.msra.mxu0 0.0
        %885 = vmatprep.subr.mxu0 0.0
        %886 = vmatpush1.msra.mxu0 0.0
        %887 = vmatprep.subr.mxu0 0.0
        %888 = vmatpush1.msra.mxu0 0.0
        %889 = vmatprep.subr.mxu0 0.0
        %890 = vmatpush1.msra.mxu0 0.0
        %891 = vmatprep.subr.mxu0 0.0
        %892 = vmatpush1.msra.mxu0 0.0
        %893 = vmatprep.subr.mxu0 0.0
        %894 = vmatpush1.msra.mxu0 0.0
        %895 = vmatprep.subr.mxu0 0.0
        %896 = vmatpush1.msra.mxu0 0.0
        %897 = vmatprep.subr.mxu0 0.0
        %898 = vmatpush1.msra.mxu0 0.0
        %899 = vmatprep.subr.mxu0 0.0
        %900 = vmatpush1.msra.mxu0 0.0
        %901 = vmatprep.subr.mxu0 0.0
        %902 = vmatpush1.msra.mxu0 0.0
        %903 = vmatprep.subr.mxu0 0.0
        %904 = vmatpush1.msra.mxu0 0.0
        %905 = vmatprep.subr.mxu0 0.0
        %906 = vmatpush1.msra.mxu0 0.0
        %907 = vmatprep.subr.mxu0 0.0
        %908 = vmatpush1.msra.mxu0 0.0
        %909 = vmatprep.mubr.f32.mxu0 0.0
        %910 = vmatmul.mubr.f32.gmra.mrb[0].mxu0 %v813
        %v911 = vpop.f32.mrb[0].mxu0
        %v912 = vadd.f32 0.0, %v911
        %v913 = vpop.f32.mrb[0].mxu0
        %914 = vmatprep.mubr.f32.mxu0 0.0
        %915 = vmatmul.mubr.f32.gmra.mrb[0].mxu0 %v814
        %v916 = vpop.f32.mrb[0].mxu0
        %v917 = vadd.f32 0.0, %v916
        %v918 = vpop.f32.mrb[0].mxu0
        %919 = vmatprep.mubr.f32.mxu0 0.0
        %920 = vmatmul.mubr.f32.gmra.mrb[0].mxu0 %v815
        %v921 = vpop.f32.mrb[0].mxu0
        %v922 = vadd.f32 0.0, %v921
        %v923 = vpop.f32.mrb[0].mxu0
        %924 = vmatprep.mubr.f32.mxu0 0.0
        %925 = vmatmul.mubr.f32.gmra.mrb[0].mxu0 %v816
        %v926 = vpop.f32.mrb[0].mxu0
        %v927 = vadd.f32 0.0, %v926
        %v928 = vpop.f32.mrb[0].mxu0
        %929 = vmatprep.mubr.f32.mxu0 0.0
        %930 = vmatmul.mubr.f32.gmra.mrb[0].mxu0 %v817
        %v931 = vpop.f32.mrb[0].mxu0
        %v932 = vadd.f32 0.0, %v931
        %v933 = vpop.f32.mrb[0].mxu0
        %934 = vmatprep.mubr.f32.mxu0 0.0
        %935 = vmatmul.mubr.f32.gmra.mrb[0].mxu0 %v818
        %v936 = vpop.f32.mrb[0].mxu0
        %v937 = vadd.f32 0.0, %v936
        %v938 = vpop.f32.mrb[0].mxu0
        %939 = vmatprep.mubr.f32.mxu0 0.0
        %940 = vmatmul.mubr.f32.gmra.mrb[0].mxu0 %v819
        %v941 = vpop.f32.mrb[0].mxu0
        %v942 = vadd.f32 0.0, %v941
        %v943 = vpop.f32.mrb[0].mxu0
        %944 = vmatprep.mubr.f32.mxu0 0.0
        %945 = vmatmul.mubr.f32.gmra.mrb[0].mxu0 %v820
        %v946 = vpop.f32.mrb[0].mxu0
        %v947 = vadd.f32 0.0, %v946
        %v948 = vpop.f32.mrb[0].mxu0
        %949 = vmatprep.mubr.f32.mxu0 0.0
        %950 = vmatmul.mubr.f32.gmra.mrb[0].mxu0 %v821
        %v951 = vpop.f32.mrb[0].mxu0
        %v952 = vadd.f32 0.0, %v951
        %v953 = vpop.f32.mrb[0].mxu0
        %954 = vmatprep.mubr.f32.mxu0 0.0
        %955 = vmatmul.mubr.f32.gmra.mrb[0].mxu0 %v822
        %v956 = vpop.f32.mrb[0].mxu0
        %v957 = vadd.f32 0.0, %v956
        %v958 = vpop.f32.mrb[0].mxu0
        %959 = vmatprep.mubr.f32.mxu0 0.0
        %960 = vmatmul.mubr.f32.gmra.mrb[0].mxu0 %v823
        %v961 = vpop.f32.mrb[0].mxu0
        %v962 = vadd.f32 0.0, %v961
        %v963 = vpop.f32.mrb[0].mxu0
        %964 = vmatprep.mubr.f32.mxu0 0.0
        %965 = vmatmul.mubr.f32.gmra.mrb[0].mxu0 %v824
        %v966 = vpop.f32.mrb[0].mxu0
        %v967 = vadd.f32 0.0, %v966
        %v968 = vpop.f32.mrb[0].mxu0
        %969 = vmatprep.mubr.f32.mxu0 0.0
        %970 = vmatmul.mubr.f32.gmra.mrb[0].mxu0 %v825
        %v971 = vpop.f32.mrb[0].mxu0
        %v972 = vadd.f32 0.0, %v971
        %v973 = vpop.f32.mrb[0].mxu0
        %974 = vmatprep.mubr.f32.mxu0 0.0
        %975 = vmatmul.mubr.f32.gmra.mrb[0].mxu0 %v826
        %v976 = vpop.f32.mrb[0].mxu0
        %v977 = vadd.f32 0.0, %v976
        %v978 = vpop.f32.mrb[0].mxu0
        %979 = vmatprep.mubr.f32.mxu0 0.0
        %980 = vmatmul.mubr.f32.gmra.mrb[0].mxu0 %v827
        %v981 = vpop.f32.mrb[0].mxu0
        %v982 = vadd.f32 0.0, %v981
        %v983 = vpop.f32.mrb[0].mxu0
        %984 = vmatprep.mubr.f32.mxu0 0.0
        %985 = vmatmul.mubr.f32.gmra.mrb[0].mxu0 %v828
        %v986 = vpop.f32.mrb[0].mxu0
        %v987 = vadd.f32 0.0, %v986
        %v988 = vpop.f32.mrb[0].mxu0
        %989 = vmatprep.mubr.f32.mxu0 0.0
        %990 = vmatmul.mubr.f32.gmra.mrb[0].mxu0 %v829
        %v991 = vpop.f32.mrb[0].mxu0
        %v992 = vadd.f32 0.0, %v991
        %v993 = vpop.f32.mrb[0].mxu0
        %994 = vmatprep.mubr.f32.mxu0 0.0
        %995 = vmatmul.mubr.f32.gmra.mrb[0].mxu0 %v830
        %v996 = vpop.f32.mrb[0].mxu0
        %v997 = vadd.f32 0.0, %v996
        %v998 = vpop.f32.mrb[0].mxu0
        %999 = vmatprep.mubr.f32.mxu0 0.0
        %1000 = vmatmul.mubr.f32.gmra.mrb[0].mxu0 %v831
        %v1001 = vpop.f32.mrb[0].mxu0
        %v1002 = vadd.f32 0.0, %v1001
        %v1003 = vpop.f32.mrb[0].mxu0
        %1004 = vmatprep.mubr.f32.mxu0 0.0
        %1005 = vmatmul.mubr.f32.gmra.mrb[0].mxu0 %v832
        %v1006 = vpop.f32.mrb[0].mxu0
        %v1007 = vadd.f32 0.0, %v1006
        %v1008 = vpop.f32.mrb[0].mxu0
        %1009 = vmatprep.mubr.f32.mxu0 0.0
        %1010 = vmatmul.mubr.f32.gmra.mrb[0].mxu0 %v833
        %v1011 = vpop.f32.mrb[0].mxu0
        %v1012 = vadd.f32 0.0, %v1011
        %v1013 = vpop.f32.mrb[0].mxu0
        %1014 = vmatprep.mubr.f32.mxu0 0.0
        %1015 = vmatmul.mubr.f32.gmra.mrb[0].mxu0 %v834
        %v1016 = vpop.f32.mrb[0].mxu0
        %v1017 = vadd.f32 0.0, %v1016
        %v1018 = vpop.f32.mrb[0].mxu0
        %1019 = vmatprep.mubr.f32.mxu0 0.0
        %1020 = vmatmul.mubr.f32.gmra.mrb[0].mxu0 %v835
        %v1021 = vpop.f32.mrb[0].mxu0
        %v1022 = vadd.f32 0.0, %v1021
        %v1023 = vpop.f32.mrb[0].mxu0
        %1024 = vmatprep.mubr.f32.mxu0 0.0
        %1025 = vmatmul.mubr.f32.gmra.mrb[0].mxu0 %v836
        %v1026 = vpop.f32.mrb[0].mxu0
        %v1027 = vadd.f32 0.0, %v1026
        %v1028 = vpop.f32.mrb[0].mxu0
        %1029 = vmatprep.mubr.f32.mxu0 0.0
        %1030 = vmatmul.mubr.f32.gmra.mrb[0].mxu0 %v837
        %v1031 = vpop.f32.mrb[0].mxu0
        %v1032 = vadd.f32 0.0, %v1031
        %v1033 = vpop.f32.mrb[0].mxu0
        %1034 = vmatprep.mubr.f32.mxu0 0.0
        %1035 = vmatmul.mubr.f32.gmra.mrb[0].mxu0 %v838
        %v1036 = vpop.f32.mrb[0].mxu0
        %v1037 = vadd.f32 0.0, %v1036
        %v1038 = vpop.f32.mrb[0].mxu0
        %1039 = vmatprep.mubr.f32.mxu0 0.0
        %1040 = vmatmul.mubr.f32.gmra.mrb[0].mxu0 %v839
        %v1041 = vpop.f32.mrb[0].mxu0
        %v1042 = vadd.f32 0.0, %v1041
        %v1043 = vpop.f32.mrb[0].mxu0
        %1044 = vmatprep.mubr.f32.mxu0 0.0
        %1045 = vmatmul.mubr.f32.gmra.mrb[0].mxu0 %v840
        %v1046 = vpop.f32.mrb[0].mxu0
        %v1047 = vadd.f32 0.0, %v1046
        %v1048 = vpop.f32.mrb[0].mxu0
        %1049 = vmatprep.mubr.f32.mxu0 0.0
        %1050 = vmatmul.mubr.f32.gmra.mrb[0].mxu0 %v841
        %v1051 = vpop.f32.mrb[0].mxu0
        %v1052 = vadd.f32 0.0, %v1051
        %v1053 = vpop.f32.mrb[0].mxu0
        %1054 = vmatprep.mubr.f32.mxu0 0.0
        %1055 = vmatmul.mubr.f32.gmra.mrb[0].mxu0 %v842
        %v1056 = vpop.f32.mrb[0].mxu0
        %v1057 = vadd.f32 0.0, %v1056
        %v1058 = vpop.f32.mrb[0].mxu0
        %1059 = vmatprep.mubr.f32.mxu0 0.0
        %1060 = vmatmul.mubr.f32.gmra.mrb[0].mxu0 %v843
        %v1061 = vpop.f32.mrb[0].mxu0
        %v1062 = vadd.f32 0.0, %v1061
        %v1063 = vpop.f32.mrb[0].mxu0
        %1064 = vmatprep.mubr.f32.mxu0 0.0
        %1065 = vmatmul.mubr.f32.gmra.mrb[0].mxu0 %v844
        %v1066 = vpop.f32.mrb[0].mxu0
        %v1067 = vadd.f32 0.0, %v1066
        %v1068 = vpop.f32.mrb[0].mxu0
        %1069 = vdwg.mxu0
        %1070 = vst [vmem:[%s157] sm:$0xff] %v912
        %1071 = vst [vmem:[%s157 + $0x8] sm:$0xff] %v917
        %1072 = vst [vmem:[%s157 + $0x10] sm:$0xff] %v922
        %1073 = vst [vmem:[%s157 + $0x18] sm:$0xff] %v927
        %1074 = vst [vmem:[%s157 + $0x20] sm:$0xff] %v932
        %1075 = vst [vmem:[%s157 + $0x28] sm:$0xff] %v937
        %1076 = vst [vmem:[%s157 + $0x30] sm:$0xff] %v942
        %1077 = vst [vmem:[%s157 + $0x38] sm:$0xff] %v947
        %1078 = vst [vmem:[%s157 + $0x40] sm:$0xff] %v952
        %1079 = vst [vmem:[%s157 + $0x48] sm:$0xff] %v957
        %1080 = vst [vmem:[%s157 + $0x50] sm:$0xff] %v962
        %1081 = vst [vmem:[%s157 + $0x58] sm:$0xff] %v967
        %1082 = vst [vmem:[%s157 + $0x60] sm:$0xff] %v972
        %1083 = vst [vmem:[%s157 + $0x68] sm:$0xff] %v977
        %1084 = vst [vmem:[%s157 + $0x70] sm:$0xff] %v982
        %1085 = vst [vmem:[%s157 + $0x78] sm:$0xff] %v987
        %1086 = vst [vmem:[%s157 + $0x80] sm:$0xff] %v992
        %1087 = vst [vmem:[%s157 + $0x88] sm:$0xff] %v997
        %1088 = vst [vmem:[%s157 + $0x90] sm:$0xff] %v1002
        %1089 = vst [vmem:[%s157 + $0x98] sm:$0xff] %v1007
        %1090 = vst [vmem:[%s157 + $0xa0] sm:$0xff] %v1012
        %1091 = vst [vmem:[%s157 + $0xa8] sm:$0xff] %v1017
        %1092 = vst [vmem:[%s157 + $0xb0] sm:$0xff] %v1022
        %1093 = vst [vmem:[%s157 + $0xb8] sm:$0xff] %v1027
        %1094 = vst [vmem:[%s157 + $0xc0] sm:$0xff] %v1032
        %1095 = vst [vmem:[%s157 + $0xc8] sm:$0xff] %v1037
        %1096 = vst [vmem:[%s157 + $0xd0] sm:$0xff] %v1042
        %1097 = vst [vmem:[%s157 + $0xd8] sm:$0xff] %v1047
        %1098 = vst [vmem:[%s157 + $0xe0] sm:$0xff] %v1052
        %1099 = vst [vmem:[%s157 + $0xe8] sm:$0xff] %v1057
        %1100 = vst [vmem:[%s157 + $0xf0] sm:$0xff] %v1062
        %1101 = vst [vmem:[%s157 + $0xf8] sm:$0xff] %v1067
        %s1102 = smul.u32 8, %s14
        %p1103 = scmp.lt.s32.totalorder %s1102, 15
        %s1104 = scalar_select %p1103, %s1102, 15
        %s1105 = smul.addr %s1104, 4
        %s1106 = smul.addr %s1105, 8
        %s1107 = scalar_lea.vmem %s2, %s1106
        // Predicated region
        $region33: #{mlp_jacobian_batched.1} parent=27 // pred_check
          %p1108 = pneg %p79
        $region34: #{mlp_jacobian_batched.1} parent=27 // pred_check_branch
          %1110 = sbr.rel (%p1108) target = $region36
        $region35: #{mlp_jacobian_batched.1} parent=27 // pred_region
          %s1111 = smul.u32 8, %s14
        $region36: #{mlp_jacobian_batched.1} parent=27 // pred_fallthru
          _
      $region28: #{mlp_jacobian_batched.1} parent=5 // pred_fallthru
        _
      %p1112 = scmp.le.s32.totalorder 2, %s9
      // Predicated region
      $region37: #{mlp_jacobian_batched.1} parent=5 // pred_check
        %p1113 = pneg %p1112
      $region38: #{mlp_jacobian_batched.1} parent=5 // pred_check_branch
        %1115 = sbr.rel (%p1113) target = $region40
      $region39: #{mlp_jacobian_batched.1} parent=5 // pred_region
        %s1116 = ssub.s32 %s9, 2
        // Predicated region
        $region41: #{mlp_jacobian_batched.1} parent=39 // pred_check
          %p1117 = pneg %p85
        $region42: #{mlp_jacobian_batched.1} parent=39 // pred_check_branch
          %1119 = sbr.rel (%p1117) target = $region44
        $region43: #{mlp_jacobian_batched.1} parent=39 // pred_region
          %s1120 = smul.u32 8, %s15
          %p1121 = scmp.lt.s32.totalorder %s1120, 15
          %s1122 = scalar_select %p1121, %s1120, 15
          %s1123 = smul.addr %s1122, 4
          %s1124 = smul.addr %s1123, 8
          %s1125 = scalar_lea.vmem %s2, %s1124
        $region44: #{mlp_jacobian_batched.1} parent=39 // pred_fallthru
          _
      $region40: #{mlp_jacobian_batched.1} parent=5 // pred_fallthru
        _
    $region6: #{mlp_jacobian_batched.1} parent=1 // loop_footer
      %s13 = sadd.s32 1, %s9
    $region7: #{mlp_jacobian_batched.1} parent=1 // loop_footer_branch
      %8 = sbr.rel target = $region3
    $region8: #{mlp_jacobian_batched.1} parent=1 // loop_exit
      _
    %1126 = vsyncpa [#allocation3], 1
    %s1127 = scalar_lea.sflag [#allocation3], 1
    %1128 = vsyncpa %s1127, 1

</llo_original>
